<compile_context>
chip_gen: v7x
topology: tpu7x:2x2x1
jax: 0.10.0
libtpu: 0.0.40
codegen_flags: <defaults>
</compile_context>

<pallas_src>
import jax
import jax.numpy as jnp
from jax.experimental import pallas as pl
from jax.experimental.pallas import tpu as pltpu

_MIB = 1024 * 1024


def _round_up(x, m):
    return (x + m - 1) // m * m


def _tpu_hw_info():
    """Best-effort (device_kind, is_v7x, vmem_capacity_bytes)."""
    kind = ""
    try:
        kind = jax.devices()[0].device_kind.lower()
    except Exception:
        pass
    vmem_cap = None
    try:
        vmem_cap = int(pltpu.get_tpu_info().vmem_capacity_bytes)
    except Exception:
        pass
    is_v7 = ("v7" in kind) or (vmem_cap is not None and vmem_cap <= 64 * _MIB)
    if vmem_cap is None:
        vmem_cap = (64 if is_v7 else 128) * _MIB
    return kind, is_v7, vmem_cap


def _gated_mlp_kernel(x_ref, wg_ref, wu_ref, bg_ref, bu_ref, wd_ref, bd_ref,
                      o_ref, acc_ref):
    j = pl.program_id(1)

    x = x_ref[...]

    # Gate / up column tiles: [tm, H] @ [H, ti] -> [tm, ti] in f32 (MXU).
    gate = jnp.dot(x, wg_ref[...], preferred_element_type=jnp.float32)
    gate = gate + bg_ref[...].astype(jnp.float32)
    up = jnp.dot(x, wu_ref[...], preferred_element_type=jnp.float32)
    up = up + bu_ref[...].astype(jnp.float32)

    # SwiGLU in f32 (VPU + EUP): silu(gate) * up.
    act = (gate * jax.nn.sigmoid(gate)) * up

    # Partial down projection for this I tile.
    partial = jnp.dot(act.astype(wd_ref.dtype), wd_ref[...],
                      preferred_element_type=jnp.float32)

    # Fold the init into the first partial (no zero-store + RMW on j == 0).
    @pl.when(j == 0)
    def _():
        acc_ref[...] = partial

    @pl.when(j != 0)
    def _():
        acc_ref[...] += partial

    # Down bias only once, at the last I tile.
    @pl.when(j == pl.num_programs(1) - 1)
    def _():
        o_ref[...] = (acc_ref[...]
                      + bd_ref[...].astype(jnp.float32)).astype(o_ref.dtype)


def gated_mlp(x, w_gate_up, b_gate_up, w_down, b_down, *, tm=None, ti=None):
    """Fused GatedMLP forward.

    x:          [T, H]
    w_gate_up:  [H, 2*I]   (torch Linear weight [2I, H] transposed)
    b_gate_up:  [2*I]
    w_down:     [I, H]     (torch Linear weight [H, I] transposed)
    b_down:     [H]
    returns:    [T, H]
    """
    T, H = x.shape
    two_i = w_gate_up.shape[1]
    I = two_i // 2
    assert w_gate_up.shape == (H, two_i)
    assert w_down.shape == (I, H)
    assert b_gate_up.shape == (two_i,)
    assert b_down.shape == (H,)
    assert H % 128 == 0, "hidden_size must be a multiple of 128 (lane dim)"
    assert I % 128 == 0, "intermediate_size must be a multiple of 128"

    x_item = jnp.dtype(x.dtype).itemsize
    w_item = jnp.dtype(w_gate_up.dtype).itemsize
    wd_item = jnp.dtype(w_down.dtype).itemsize
    bgu_item = jnp.dtype(b_gate_up.dtype).itemsize
    bd_item = jnp.dtype(b_down.dtype).itemsize
    out_item = x_item
    sub = 16 if x_item < 4 else 8            # sublane packing bf16 / f32

    kind, is_v7, vmem_cap = _tpu_hw_info()
    is_v5e = ("v5 lite" in kind) or ("v5e" in kind)

    # Per-generation defaults (arithmetic intensity vs HBM ~ 2*tm/itemsize).
    if is_v7:
        tm_d, ti_d = 512, 256
        vmem_budget = min(52 * _MIB, int(vmem_cap * 0.82))
    elif is_v5e:
        tm_d, ti_d = 512, 256
        vmem_budget = min(100 * _MIB, int(vmem_cap * 0.78))
    else:  # v6e and default
        tm_d = 768 if x_item < 4 else 512
        ti_d = 512
        vmem_budget = min(100 * _MIB, int(vmem_cap * 0.78))

    if tm is None:
        tm = tm_d
    if ti is None:
        ti = ti_d

    # Clamp the token tile to the (possibly small) problem; keep sublane mult.
    tm = max(sub, min(_round_up(tm, sub), _round_up(T, sub)))

    # On v7x, make sure the token axis has >= 2 tiles when T allows so both
    # TensorCores get work under CORE_PARALLEL.
    if is_v7 and T > sub and pl.cdiv(T, tm) < 2:
        tm = max(sub, _round_up(pl.cdiv(T, 2), sub))

    # Decode regime (tiny token tile): fewer, larger weight DMAs.
    if tm <= 64:
        ti = max(ti, 1024)

    ti = min(ti, I)
    while I % ti != 0:
        ti //= 2
    assert ti % 128 == 0 and I % ti == 0

    # Per-step VMEM footprint (double-buffered streamed operands + resident
    # f32 accumulator), sized with each operand's own itemsize.
    def _need(tm_, ti_):
        return (2 * tm_ * H * x_item            # x tile
                + 2 * 2 * H * ti_ * w_item      # gate + up weight tiles
                + 2 * ti_ * H * wd_item         # down weight tile
                + 2 * 2 * ti_ * bgu_item        # gate/up bias tiles
                + 2 * H * bd_item               # down bias
                + tm_ * H * 4                   # f32 accumulator scratch
                + 2 * tm_ * H * out_item)       # output tile

    # Shrink tiles if the footprint would overrun the per-generation budget.
    while _need(tm, ti) * 1.15 > vmem_budget:
        if ti > 128 and ti % 256 == 0:
            ti //= 2
        elif tm > 2 * sub:
            tm = max(sub, _round_up(tm // 2, sub))
        else:
            break

    n_t = pl.cdiv(T, tm)                       # partial last block handled by Pallas
    n_i = I // ti
    grid = (n_t, n_i)

    # Fused bias as a (1, 2I) row so it streams from the same array twice.
    b_gu2 = b_gate_up.reshape(1, two_i)
    b_d2 = b_down.reshape(1, H)

    # Advisory cost estimate (weights are re-streamed once per token tile).
    flops = 2 * T * H * two_i + 2 * T * I * H
    bytes_accessed = (
        T * H * x_item
        + n_t * (w_gate_up.size * w_item + w_down.size * wd_item
                 + b_gate_up.size * bgu_item + b_down.size * bd_item)
        + T * H * out_item)
    cost = pl.CostEstimate(flops=flops, transcendentals=T * I,
                           bytes_accessed=bytes_accessed)

    vmem_limit = int(min(max(int(_need(tm, ti) * 1.25), 32 * _MIB),
                         vmem_budget))

    if is_v7:
        dim_sem = (pltpu.CORE_PARALLEL, pltpu.ARBITRARY)
    else:
        dim_sem = ("parallel", "arbitrary")

    out = pl.pallas_call(
        _gated_mlp_kernel,
        out_shape=jax.ShapeDtypeStruct((T, H), x.dtype),
        grid_spec=pltpu.PrefetchScalarGridSpec(
            num_scalar_prefetch=0,
            grid=grid,
            in_specs=[
                pl.BlockSpec((tm, H), lambda i, j: (i, 0)),          # x tile
                pl.BlockSpec((H, ti), lambda i, j: (0, j)),          # gate W cols
                pl.BlockSpec((H, ti), lambda i, j: (0, n_i + j)),    # up W cols
                pl.BlockSpec((1, ti), lambda i, j: (0, j)),          # gate bias
                pl.BlockSpec((1, ti), lambda i, j: (0, n_i + j)),    # up bias
                pl.BlockSpec((ti, H), lambda i, j: (j, 0)),          # down W tile
                pl.BlockSpec((1, H), lambda i, j: (0, 0)),           # down bias
            ],
            out_specs=pl.BlockSpec((tm, H), lambda i, j: (i, 0)),
            scratch_shapes=[pltpu.VMEM((tm, H), jnp.float32)],
        ),
        compiler_params=pltpu.CompilerParams(
            dimension_semantics=dim_sem,
            vmem_limit_bytes=vmem_limit),
        cost_estimate=cost,
    )(x, w_gate_up, w_gate_up, b_gu2, b_gu2, w_down, b_d2)

    return out


def gated_mlp_ref(x, w_gate_up, b_gate_up, w_down, b_down):
    h = x @ w_gate_up + b_gate_up
    I = w_gate_up.shape[1] // 2
    gate, up = h[:, :I], h[:, I:]
    act = jax.nn.silu(gate) * up
    return act @ w_down + b_down


if __name__ == "__main__":
    # Small, TPU-friendly sizes: batch=2, seq=8 -> 16 tokens,
    # hidden=128, intermediate=256, bias=True.
    batch, seq = 2, 8
    hidden_size = 128
    intermediate_size = 256

    key = jax.random.PRNGKey(0)
    k_x, k_wgu, k_bgu, k_wd, k_bd = jax.random.split(key, 5)

    x = jax.random.normal(k_x, (batch, seq, hidden_size), dtype=jnp.float32)
    # torch Linear weights are [out, in]; we store the transpose [in, out].
    w_gate_up = (jax.random.normal(
        k_wgu, (hidden_size, 2 * intermediate_size), dtype=jnp.float32)
        * (hidden_size ** -0.5))
    b_gate_up = jax.random.normal(
        k_bgu, (2 * intermediate_size,), dtype=jnp.float32) * 0.01
    w_down = (jax.random.normal(
        k_wd, (intermediate_size, hidden_size), dtype=jnp.float32)
        * (intermediate_size ** -0.5))
    b_down = jax.random.normal(k_bd, (hidden_size,), dtype=jnp.float32) * 0.01

    x2d = x.reshape(batch * seq, hidden_size)
    ref = gated_mlp_ref(x2d, w_gate_up, b_gate_up, w_down, b_down)

    # f32 path: tight correctness check.
    out_f32 = jax.block_until_ready(
        gated_mlp(x2d, w_gate_up, b_gate_up, w_down, b_down))
    assert out_f32.shape == (batch * seq, hidden_size)
    assert jnp.allclose(out_f32, ref, atol=1e-4, rtol=1e-4), \
        "f32 mismatch vs reference"

    # Ragged token count (exercises the un-padded partial last token block).
    T_odd = 12
    ref_odd = gated_mlp_ref(x2d[:T_odd], w_gate_up, b_gate_up, w_down, b_down)
    out_odd = jax.block_until_ready(
        gated_mlp(x2d[:T_odd], w_gate_up, b_gate_up, w_down, b_down))
    assert out_odd.shape == (T_odd, hidden_size)
    assert jnp.allclose(out_odd, ref_odd, atol=1e-4, rtol=1e-4), \
        "ragged-T f32 mismatch vs reference"

    # bf16 path (MXU-friendly dtype on v6e/v7x): loose check vs f32 reference.
    bf = jnp.bfloat16
    out_bf16 = jax.block_until_ready(
        gated_mlp(x2d.astype(bf), w_gate_up.astype(bf), b_gate_up.astype(bf),
                  w_down.astype(bf), b_down.astype(bf)))
    max_err = float(jnp.max(jnp.abs(out_bf16.astype(jnp.float32) - ref)))
    assert max_err < 0.15, f"bf16 mismatch vs reference (max abs err {max_err})"

    print("KERNEL_OK")
</pallas_src>

<mosaic_0001>
module attributes {stable_mosaic.version = 11 : i64} {
  func.func @_gated_mlp_kernel(%arg0: i32, %arg1: i32, %arg2: memref<16x128xf32, #tpu.memory_space<vmem>>, %arg3: memref<128x256xf32, #tpu.memory_space<vmem>>, %arg4: memref<128x256xf32, #tpu.memory_space<vmem>>, %arg5: memref<1x256xf32, #tpu.memory_space<vmem>>, %arg6: memref<1x256xf32, #tpu.memory_space<vmem>>, %arg7: memref<256x128xf32, #tpu.memory_space<vmem>>, %arg8: memref<1x128xf32, #tpu.memory_space<vmem>>, %arg9: memref<16x128xf32, #tpu.memory_space<vmem>>, %arg10: memref<16x128xf32, #tpu.memory_space<vmem>>) attributes {dimension_semantics = [#tpu.dimension_semantics<parallel>, #tpu.dimension_semantics<arbitrary>], iteration_bounds = array<i64: 1, 1>, scalar_prefetch = 0 : i64, scratch_operands = 1 : i64, tpu.core_type = #tpu.core_type<tc>, window_params = [{transform_indices = @transform_0, window_bounds = array<i64: 16, 128>}, {transform_indices = @transform_1, window_bounds = array<i64: 128, 256>}, {transform_indices = @transform_2, window_bounds = array<i64: 128, 256>}, {transform_indices = @transform_3, window_bounds = array<i64: 1, 256>}, {transform_indices = @transform_4, window_bounds = array<i64: 1, 256>}, {transform_indices = @transform_5, window_bounds = array<i64: 256, 128>}, {pipeline_mode = #tpu.pipeline_mode<synchronous>, transform_indices = @transform_6, window_bounds = array<i64: 1, 128>}, {transform_indices = @transform_7, window_bounds = array<i64: 16, 128>}]} {
    %c0 = arith.constant 0 : index
    %c0_0 = arith.constant 0 : index
    %0 = vector.load %arg2[%c0, %c0_0] : memref<16x128xf32, #tpu.memory_space<vmem>>, vector<16x128xf32>
    %c0_1 = arith.constant 0 : index
    %c0_2 = arith.constant 0 : index
    %1 = vector.load %arg3[%c0_1, %c0_2] : memref<128x256xf32, #tpu.memory_space<vmem>>, vector<128x256xf32>
    %cst = arith.constant dense<0.000000e+00> : vector<16x256xf32>
    %2 = tpu.matmul %0, %1, %cst {dimension_numbers = #tpu.dot_dimension_numbers<[1], [0], [0], [1], [0, 0, 1, 1], [], []>} : vector<16x128xf32>, vector<128x256xf32>, vector<16x256xf32> -> vector<16x256xf32>
    %c0_3 = arith.constant 0 : index
    %c0_4 = arith.constant 0 : index
    %3 = vector.load %arg5[%c0_3, %c0_4] : memref<1x256xf32, #tpu.memory_space<vmem>>, vector<1x256xf32>
    %4 = vector.broadcast %3 : vector<1x256xf32> to vector<16x256xf32>
    %5 = arith.addf %2, %4 : vector<16x256xf32>
    %c0_5 = arith.constant 0 : index
    %c0_6 = arith.constant 0 : index
    %6 = vector.load %arg4[%c0_5, %c0_6] : memref<128x256xf32, #tpu.memory_space<vmem>>, vector<128x256xf32>
    %cst_7 = arith.constant dense<0.000000e+00> : vector<16x256xf32>
    %7 = tpu.matmul %0, %6, %cst_7 {dimension_numbers = #tpu.dot_dimension_numbers<[1], [0], [0], [1], [0, 0, 1, 1], [], []>} : vector<16x128xf32>, vector<128x256xf32>, vector<16x256xf32> -> vector<16x256xf32>
    %c0_8 = arith.constant 0 : index
    %c0_9 = arith.constant 0 : index
    %8 = vector.load %arg6[%c0_8, %c0_9] : memref<1x256xf32, #tpu.memory_space<vmem>>, vector<1x256xf32>
    %9 = vector.broadcast %8 : vector<1x256xf32> to vector<16x256xf32>
    %10 = arith.addf %7, %9 : vector<16x256xf32>
    %11 = arith.negf %5 : vector<16x256xf32>
    %12 = math.exp %11 : vector<16x256xf32>
    %cst_10 = arith.constant 1.000000e+00 : f32
    %13 = vector.broadcast %cst_10 : f32 to vector<16x256xf32>
    %14 = arith.addf %13, %12 : vector<16x256xf32>
    %15 = arith.divf %13, %14 : vector<16x256xf32>
    %16 = arith.mulf %5, %15 : vector<16x256xf32>
    %17 = arith.mulf %16, %10 : vector<16x256xf32>
    %c0_11 = arith.constant 0 : index
    %c0_12 = arith.constant 0 : index
    %18 = vector.load %arg7[%c0_11, %c0_12] : memref<256x128xf32, #tpu.memory_space<vmem>>, vector<256x128xf32>
    %cst_13 = arith.constant dense<0.000000e+00> : vector<16x128xf32>
    %19 = tpu.matmul %17, %18, %cst_13 {dimension_numbers = #tpu.dot_dimension_numbers<[1], [0], [0], [1], [0, 0, 1, 1], [], []>} : vector<16x256xf32>, vector<256x128xf32>, vector<16x128xf32> -> vector<16x128xf32>
    %c0_i32 = arith.constant 0 : i32
    %20 = arith.cmpi eq, %arg1, %c0_i32 : i32
    %21 = arith.extui %20 : i1 to i32
    %c0_i32_14 = arith.constant 0 : i32
    %22 = arith.cmpi ne, %21, %c0_i32_14 : i32
    scf.if %22 {
      %c0_19 = arith.constant 0 : index
      %c0_20 = arith.constant 0 : index
      %29 = vector.load %arg10[%c0_19, %c0_20] : memref<16x128xf32, #tpu.memory_space<vmem>>, vector<16x128xf32>
      tpu.vector_store %arg10[%c0_19, %c0_20], %19 {strides = array<i32>} : memref<16x128xf32, #tpu.memory_space<vmem>>, vector<16x128xf32>,
    } else {
    }
    %c0_i32_15 = arith.constant 0 : i32
    %23 = arith.cmpi ne, %arg1, %c0_i32_15 : i32
    %24 = arith.extui %23 : i1 to i32
    %c0_i32_16 = arith.constant 0 : i32
    %25 = arith.cmpi ne, %24, %c0_i32_16 : i32
    scf.if %25 {
      %c0_19 = arith.constant 0 : index
      %c0_20 = arith.constant 0 : index
      %29 = vector.load %arg10[%c0_19, %c0_20] : memref<16x128xf32, #tpu.memory_space<vmem>>, vector<16x128xf32>
      %30 = arith.addf %29, %19 : vector<16x128xf32>
      %c0_21 = arith.constant 0 : index
      %c0_22 = arith.constant 0 : index
      %31 = vector.load %arg10[%c0_21, %c0_22] : memref<16x128xf32, #tpu.memory_space<vmem>>, vector<16x128xf32>
      tpu.vector_store %arg10[%c0_21, %c0_22], %30 {strides = array<i32>} : memref<16x128xf32, #tpu.memory_space<vmem>>, vector<16x128xf32>,
    } else {
    }
    %c0_i32_17 = arith.constant 0 : i32
    %26 = arith.cmpi eq, %arg1, %c0_i32_17 : i32
    %27 = arith.extui %26 : i1 to i32
    %c0_i32_18 = arith.constant 0 : i32
    %28 = arith.cmpi ne, %27, %c0_i32_18 : i32
    scf.if %28 {
      %c0_19 = arith.constant 0 : index
      %c0_20 = arith.constant 0 : index
      %29 = vector.load %arg10[%c0_19, %c0_20] : memref<16x128xf32, #tpu.memory_space<vmem>>, vector<16x128xf32>
      %c0_21 = arith.constant 0 : index
      %c0_22 = arith.constant 0 : index
      %30 = vector.load %arg8[%c0_21, %c0_22] : memref<1x128xf32, #tpu.memory_space<vmem>>, vector<1x128xf32>
      %31 = vector.broadcast %30 : vector<1x128xf32> to vector<16x128xf32>
      %32 = arith.addf %29, %31 : vector<16x128xf32>
      %c0_23 = arith.constant 0 : index
      %c0_24 = arith.constant 0 : index
      %33 = vector.load %arg9[%c0_23, %c0_24] : memref<16x128xf32, #tpu.memory_space<vmem>>, vector<16x128xf32>
      tpu.vector_store %arg9[%c0_23, %c0_24], %32 {strides = array<i32>} : memref<16x128xf32, #tpu.memory_space<vmem>>, vector<16x128xf32>,
    } else {
    }
    return
  }
  func.func @transform_0(%arg0: i32, %arg1: i32) -> (i32, i32) {
    %c0_i32 = arith.constant 0 : i32
    %c0_i32_0 = arith.constant 0 : i32
    return %arg0, %c0_i32 : i32, i32
  }
  func.func @transform_1(%arg0: i32, %arg1: i32) -> (i32, i32) {
    %c0_i32 = arith.constant 0 : i32
    %c0_i32_0 = arith.constant 0 : i32
    return %c0_i32, %arg1 : i32, i32
  }
  func.func @transform_2(%arg0: i32, %arg1: i32) -> (i32, i32) {
    %c1_i32 = arith.constant 1 : i32
    %0 = arith.addi %c1_i32, %arg1 : i32
    %c0_i32 = arith.constant 0 : i32
    %c0_i32_0 = arith.constant 0 : i32
    return %c0_i32, %0 : i32, i32
  }
  func.func @transform_3(%arg0: i32, %arg1: i32) -> (i32, i32) {
    %c0_i32 = arith.constant 0 : i32
    %c0_i32_0 = arith.constant 0 : i32
    return %c0_i32, %arg1 : i32, i32
  }
  func.func @transform_4(%arg0: i32, %arg1: i32) -> (i32, i32) {
    %c1_i32 = arith.constant 1 : i32
    %0 = arith.addi %c1_i32, %arg1 : i32
    %c0_i32 = arith.constant 0 : i32
    %c0_i32_0 = arith.constant 0 : i32
    return %c0_i32, %0 : i32, i32
  }
  func.func @transform_5(%arg0: i32, %arg1: i32) -> (i32, i32) {
    %c0_i32 = arith.constant 0 : i32
    %c0_i32_0 = arith.constant 0 : i32
    return %arg1, %c0_i32 : i32, i32
  }
  func.func @transform_6(%arg0: i32, %arg1: i32) -> (i32, i32) {
    %c0_i32 = arith.constant 0 : i32
    %c0_i32_0 = arith.constant 0 : i32
    %c0_i32_1 = arith.constant 0 : i32
    return %c0_i32, %c0_i32_0 : i32, i32
  }
  func.func @transform_7(%arg0: i32, %arg1: i32) -> (i32, i32) {
    %c0_i32 = arith.constant 0 : i32
    %c0_i32_0 = arith.constant 0 : i32
    return %arg0, %c0_i32 : i32, i32
  }
}

</mosaic_0001>

<llo_original>
// kernel: tpu_custom_call.1
$region0: #{tpu_custom_call.1}
  #allocation0 [shape = 'u32[]', space=smem, size = 0x4, offset = 0x4, fixed_abs, tag = 'smem constant byte address 0x4 - core index']
  #allocation1 [shape = 'u32[144,128]{1,0:T(1,128)}', space=vmem, size = 0x12000, scoped, tag = 'internal scratch']
  #allocation2 [shape = 'f32[16,128]{1,0:T(8,128)}', space=vmem, size = 0x2000, scoped, tag = 'scratch operand']
  %s0 = inlined_call_operand.hbm [shape: f32[16,128], index: 0, kind: input, shape index: {}]
  %s1 = inlined_call_operand.hbm [shape: f32[128,512], index: 1, kind: input, shape index: {}]
  %s2 = inlined_call_operand.hbm [shape: f32[128,512], index: 2, kind: input, shape index: {}]
  %s3 = inlined_call_operand.vmem [shape: f32[1,512], index: 3, kind: input, shape index: {}]
  %s4 = inlined_call_operand.vmem [shape: f32[1,512], index: 4, kind: input, shape index: {}]
  %s5 = inlined_call_operand.hbm [shape: f32[256,128], index: 5, kind: input, shape index: {}]
  %s6 = inlined_call_operand.vmem [shape: f32[1,128], index: 6, kind: input, shape index: {}]
  %s7 = inlined_call_operand.hbm [shape: f32[16,128], index: 7, kind: output, shape index: {}]
  %s8 = sld [smem:[#allocation0]]
  $region66: #{tpu_custom_call.1} parent=0
    _
  %s10 = ssub.s32 1, %s8
  %s11 = scalar_select 0, %s10, %s8
  $region1: #{tpu_custom_call.1} parent=0
    #allocation3 [shape = 'u8[8192]{0}', space=vmem, size = 0x2000, scoped, tag = 'input window, operand 0, single buffered']
    #allocation4 [shape = 's32[1]{0}', space=sflag, size = 0x4, scoped, tag = 'scoped memory for tpu_custom_call.1']
    #allocation5 [shape = 's32[1]{0}', space=sflag, size = 0x4, scoped, tag = 'scoped memory for tpu_custom_call.1']
    #allocation6 [shape = 'u8[131072]{0}', space=vmem, size = 0x20000, scoped, tag = 'input window, operand 1, single buffered']
    #allocation7 [shape = 's32[1]{0}', space=sflag, size = 0x4, scoped, tag = 'scoped memory for tpu_custom_call.1']
    #allocation8 [shape = 'u8[131072]{0}', space=vmem, size = 0x20000, scoped, tag = 'input window, operand 2, single buffered']
    #allocation9 [shape = 'u8[131072]{0}', space=vmem, size = 0x20000, scoped, tag = 'input window, operand 5, single buffered']
    #allocation10 [shape = 's32[1]{0}', space=sflag, size = 0x4, scoped, tag = 'scoped memory for tpu_custom_call.1']
    #allocation11 [shape = 'u8[8192]{0}', space=vmem, size = 0x2000, scoped, tag = 'output window, operand 0, single buffered']
    %12 = vsyncpa [#allocation4], 0
    %13 = vsyncpa [#allocation7], 0
    %14 = vsyncpa [#allocation10], 0
    %15 = vsyncpa [#allocation5], 0
    // Predicated region
    $region2: #{tpu_custom_call.1} parent=1 // pred_check
      _
    $region3: #{tpu_custom_call.1} parent=1 // pred_check_branch
      %17 = sbr.rel (0) target = $region5
    $region4: #{tpu_custom_call.1} parent=1 // pred_region
      %s19 = ssub.s32 256, 256
      %20 = vsyncadd [#allocation4], %s19
      %s21 = sshll.u32 [#allocation3], 4
      %s22 = int_to_ptr.vmem [resolvable:$true] %s21
      %27 = dma.hbm_to_vmem [thread:$0]  %s0, 256, %s22, [#allocation4], 128, 128, 8
    $region5: #{tpu_custom_call.1} parent=1 // pred_fallthru
      _
    // Predicated region
    $region6: #{tpu_custom_call.1} parent=1 // pred_check
      _
    $region7: #{tpu_custom_call.1} parent=1 // pred_check_branch
      %29 = sbr.rel (0) target = $region9
    $region8: #{tpu_custom_call.1} parent=1 // pred_region
      %s31 = ssub.s32 4096, 4096
      %32 = vsyncadd [#allocation7], %s31
      %s33 = sshll.u32 [#allocation6], 4
      %s34 = int_to_ptr.vmem [resolvable:$true] %s33
      %39 = dma.hbm_to_vmem [thread:$0]  %s1, 4096, %s34, [#allocation7], 512, 256, 16
    $region9: #{tpu_custom_call.1} parent=1 // pred_fallthru
      _
    // Predicated region
    $region10: #{tpu_custom_call.1} parent=1 // pred_check
      _
    $region11: #{tpu_custom_call.1} parent=1 // pred_check_branch
      %41 = sbr.rel (0) target = $region13
    $region12: #{tpu_custom_call.1} parent=1 // pred_region
      %s42 = sadd.s32 0, 1
      %s43 = smul.u32 2, %s42
      %s45 = ssub.s32 4096, 4096
      %46 = vsyncadd [#allocation7], %s45
      %s47 = smul.addr %s43, 128
      %s48 = scalar_lea.hbm %s2, %s47
      %s49 = sshll.u32 [#allocation8], 4
      %s50 = int_to_ptr.vmem [resolvable:$true] %s49
      %55 = dma.hbm_to_vmem [thread:$0]  %s48, 4096, %s50, [#allocation7], 512, 256, 16
    $region13: #{tpu_custom_call.1} parent=1 // pred_fallthru
      _
    // Predicated region
    $region14: #{tpu_custom_call.1} parent=1 // pred_check
      _
    $region15: #{tpu_custom_call.1} parent=1 // pred_check_branch
      %57 = sbr.rel (0) target = $region17
    $region16: #{tpu_custom_call.1} parent=1 // pred_region
      _
    $region17: #{tpu_custom_call.1} parent=1 // pred_fallthru
      _
    // Predicated region
    $region18: #{tpu_custom_call.1} parent=1 // pred_check
      _
    $region19: #{tpu_custom_call.1} parent=1 // pred_check_branch
      %59 = sbr.rel (0) target = $region21
    $region20: #{tpu_custom_call.1} parent=1 // pred_region
      %s60 = sadd.s32 0, 1
      %s61 = smul.u32 2, %s60
      %p62 = scmp.lt.s32.totalorder %s61, 3
      %s63 = scalar_select %p62, %s61, 3
      %s64 = scalar_lea.vmem %s4, %s63
      %s65 = sadd.s32 0, 1
      %s66 = smul.u32 2, %s65
    $region21: #{tpu_custom_call.1} parent=1 // pred_fallthru
      _
    // Predicated region
    $region22: #{tpu_custom_call.1} parent=1 // pred_check
      _
    $region23: #{tpu_custom_call.1} parent=1 // pred_check_branch
      %68 = sbr.rel (0) target = $region25
    $region24: #{tpu_custom_call.1} parent=1 // pred_region
      %s70 = ssub.s32 4096, 4096
      %71 = vsyncadd [#allocation10], %s70
      %s72 = sshll.u32 [#allocation9], 4
      %s73 = int_to_ptr.vmem [resolvable:$true] %s72
      %78 = dma.hbm_to_vmem [thread:$0]  %s5, 4096, %s73, [#allocation10], 128, 128, 8
    $region25: #{tpu_custom_call.1} parent=1 // pred_fallthru
      _
    // Predicated region
    $region26: #{tpu_custom_call.1} parent=1 // pred_check
      _
    $region27: #{tpu_custom_call.1} parent=1 // pred_check_branch
      %80 = sbr.rel (0) target = $region29
    $region28: #{tpu_custom_call.1} parent=1 // pred_region
      _
    $region29: #{tpu_custom_call.1} parent=1 // pred_fallthru
      _
    // Predicated region
    $region30: #{tpu_custom_call.1} parent=1 // pred_check
      _
    $region31: #{tpu_custom_call.1} parent=1 // pred_check_branch
      %82 = sbr.rel (0) target = $region33
    $region32: #{tpu_custom_call.1} parent=1 // pred_region
      %83 = dma.done [#allocation4], 256
    $region33: #{tpu_custom_call.1} parent=1 // pred_fallthru
      _
    // Predicated region
    $region34: #{tpu_custom_call.1} parent=1 // pred_check
      _
    $region35: #{tpu_custom_call.1} parent=1 // pred_check_branch
      %85 = sbr.rel (0) target = $region37
    $region36: #{tpu_custom_call.1} parent=1 // pred_region
      %86 = dma.done [#allocation7], 4096
    $region37: #{tpu_custom_call.1} parent=1 // pred_fallthru
      _
    // Predicated region
    $region38: #{tpu_custom_call.1} parent=1 // pred_check
      _
    $region39: #{tpu_custom_call.1} parent=1 // pred_check_branch
      %88 = sbr.rel (0) target = $region41
    $region40: #{tpu_custom_call.1} parent=1 // pred_region
      %89 = dma.done [#allocation7], 4096
    $region41: #{tpu_custom_call.1} parent=1 // pred_fallthru
      _
    // Predicated region
    $region42: #{tpu_custom_call.1} parent=1 // pred_check
      _
    $region43: #{tpu_custom_call.1} parent=1 // pred_check_branch
      %91 = sbr.rel (0) target = $region45
    $region44: #{tpu_custom_call.1} parent=1 // pred_region
      %92 = dma.done [#allocation10], 4096
    $region45: #{tpu_custom_call.1} parent=1 // pred_fallthru
      _
    %s93 = sadd.s32 0, 1
    %s94 = smul.u32 2, %s93
    %p95 = scmp.lt.s32.totalorder %s94, 3
    %s96 = scalar_select %p95, %s94, 3
    %s97 = scalar_lea.vmem %s4, %s96
    %s98 = sadd.s32 0, 1
    %s99 = smul.u32 2, %s98
    %s100 = sadd.s32 0, 1
    %s101 = smul.u32 2, %s100
    %p102 = scmp.lt.s32.totalorder %s101, 3
    %s103 = scalar_select %p102, %s101, 3
    %s104 = scalar_lea.vmem %s4, %s103
    %s105 = sadd.s32 0, 1
    %s106 = smul.u32 2, %s105
    %v107 = vld [vmem:[#allocation3] sm:$0xff]
    %v108 = vld [vmem:[#allocation3 + $0x8] sm:$0xff]
    %v109 = vld [vmem:[#allocation6] sm:$0xff]
    %v110 = vld [vmem:[#allocation6 + $0x8] sm:$0xff]
    %v111 = vld [vmem:[#allocation6 + $0x10] sm:$0xff]
    %v112 = vld [vmem:[#allocation6 + $0x18] sm:$0xff]
    %v113 = vld [vmem:[#allocation6 + $0x20] sm:$0xff]
    %v114 = vld [vmem:[#allocation6 + $0x28] sm:$0xff]
    %v115 = vld [vmem:[#allocation6 + $0x30] sm:$0xff]
    %v116 = vld [vmem:[#allocation6 + $0x38] sm:$0xff]
    %v117 = vld [vmem:[#allocation6 + $0x40] sm:$0xff]
    %v118 = vld [vmem:[#allocation6 + $0x48] sm:$0xff]
    %v119 = vld [vmem:[#allocation6 + $0x50] sm:$0xff]
    %v120 = vld [vmem:[#allocation6 + $0x58] sm:$0xff]
    %v121 = vld [vmem:[#allocation6 + $0x60] sm:$0xff]
    %v122 = vld [vmem:[#allocation6 + $0x68] sm:$0xff]
    %v123 = vld [vmem:[#allocation6 + $0x70] sm:$0xff]
    %v124 = vld [vmem:[#allocation6 + $0x78] sm:$0xff]
    %v125 = vld [vmem:[#allocation6 + $0x80] sm:$0xff]
    %v126 = vld [vmem:[#allocation6 + $0x88] sm:$0xff]
    %v127 = vld [vmem:[#allocation6 + $0x90] sm:$0xff]
    %v128 = vld [vmem:[#allocation6 + $0x98] sm:$0xff]
    %v129 = vld [vmem:[#allocation6 + $0xa0] sm:$0xff]
    %v130 = vld [vmem:[#allocation6 + $0xa8] sm:$0xff]
    %v131 = vld [vmem:[#allocation6 + $0xb0] sm:$0xff]
    %v132 = vld [vmem:[#allocation6 + $0xb8] sm:$0xff]
    %v133 = vld [vmem:[#allocation6 + $0xc0] sm:$0xff]
    %v134 = vld [vmem:[#allocation6 + $0xc8] sm:$0xff]
    %v135 = vld [vmem:[#allocation6 + $0xd0] sm:$0xff]
    %v136 = vld [vmem:[#allocation6 + $0xd8] sm:$0xff]
    %v137 = vld [vmem:[#allocation6 + $0xe0] sm:$0xff]
    %v138 = vld [vmem:[#allocation6 + $0xe8] sm:$0xff]
    %v139 = vld [vmem:[#allocation6 + $0xf0] sm:$0xff]
    %v140 = vld [vmem:[#allocation6 + $0xf8] sm:$0xff]
    %v141 = vld [vmem:[%s3] sm:$0x3]
    %v143 = vlaneseq
    %v144 = vshrl.u32 %v143, 7
    %v145 = vsub.s32 0, %v144
    %v146 = vrot.slane %v141, %v145
    %v147 = vlaneseq
    %v148 = vshrl.u32 %v147, 7
    %v149 = vsub.s32 1, %v148
    %v150 = vrot.slane %v141, %v149
    %153 = vmatprep.subr.mxu0 %v110
    %154 = vmatpush1.msra.mxu0 %v109
    %155 = vmatprep.subr.mxu0 %v112
    %156 = vmatpush1.msra.mxu0 %v111
    %157 = vmatprep.subr.mxu0 %v114
    %158 = vmatpush1.msra.mxu0 %v113
    %159 = vmatprep.subr.mxu0 %v116
    %160 = vmatpush1.msra.mxu0 %v115
    %161 = vmatprep.subr.mxu0 %v118
    %162 = vmatpush1.msra.mxu0 %v117
    %163 = vmatprep.subr.mxu0 %v120
    %164 = vmatpush1.msra.mxu0 %v119
    %165 = vmatprep.subr.mxu0 %v122
    %166 = vmatpush1.msra.mxu0 %v121
    %167 = vmatprep.subr.mxu0 %v124
    %168 = vmatpush1.msra.mxu0 %v123
    %169 = vmatprep.subr.mxu0 %v126
    %170 = vmatpush1.msra.mxu0 %v125
    %171 = vmatprep.subr.mxu0 %v128
    %172 = vmatpush1.msra.mxu0 %v127
    %173 = vmatprep.subr.mxu0 %v130
    %174 = vmatpush1.msra.mxu0 %v129
    %175 = vmatprep.subr.mxu0 %v132
    %176 = vmatpush1.msra.mxu0 %v131
    %177 = vmatprep.subr.mxu0 %v134
    %178 = vmatpush1.msra.mxu0 %v133
    %179 = vmatprep.subr.mxu0 %v136
    %180 = vmatpush1.msra.mxu0 %v135
    %181 = vmatprep.subr.mxu0 %v138
    %182 = vmatpush1.msra.mxu0 %v137
    %183 = vmatprep.subr.mxu0 %v140
    %184 = vmatpush1.msra.mxu0 %v139
    %185 = vmatprep.subr.mxu0 0.0
    %186 = vmatpush1.msra.mxu0 0.0
    %187 = vmatprep.subr.mxu0 0.0
    %188 = vmatpush1.msra.mxu0 0.0
    %189 = vmatprep.subr.mxu0 0.0
    %190 = vmatpush1.msra.mxu0 0.0
    %191 = vmatprep.subr.mxu0 0.0
    %192 = vmatpush1.msra.mxu0 0.0
    %193 = vmatprep.subr.mxu0 0.0
    %194 = vmatpush1.msra.mxu0 0.0
    %195 = vmatprep.subr.mxu0 0.0
    %196 = vmatpush1.msra.mxu0 0.0
    %197 = vmatprep.subr.mxu0 0.0
    %198 = vmatpush1.msra.mxu0 0.0
    %199 = vmatprep.subr.mxu0 0.0
    %200 = vmatpush1.msra.mxu0 0.0
    %201 = vmatprep.subr.mxu0 0.0
    %202 = vmatpush1.msra.mxu0 0.0
    %203 = vmatprep.subr.mxu0 0.0
    %204 = vmatpush1.msra.mxu0 0.0
    %205 = vmatprep.subr.mxu0 0.0
    %206 = vmatpush1.msra.mxu0 0.0
    %207 = vmatprep.subr.mxu0 0.0
    %208 = vmatpush1.msra.mxu0 0.0
    %209 = vmatprep.subr.mxu0 0.0
    %210 = vmatpush1.msra.mxu0 0.0
    %211 = vmatprep.subr.mxu0 0.0
    %212 = vmatpush1.msra.mxu0 0.0
    %213 = vmatprep.subr.mxu0 0.0
    %214 = vmatpush1.msra.mxu0 0.0
    %215 = vmatprep.subr.mxu0 0.0
    %216 = vmatpush1.msra.mxu0 0.0
    %217 = vmatprep.mubr.f32.mxu0 0.0
    %218 = vmatmul.mubr.f32.gmra.mrb[0].mxu0 %v107
    %v219 = vpop.f32.mrb[0].mxu0
    %v220 = vadd.f32 %v146, %v219
    %v221 = vpop.f32.mrb[0].mxu0
    %v222 = vadd.f32 %v150, %v221
    %223 = vmatprep.mubr.f32.mxu0 0.0
    %224 = vmatmul.mubr.f32.gmra.mrb[0].mxu0 %v108
    %v225 = vpop.f32.mrb[0].mxu0
    %v226 = vadd.f32 %v146, %v225
    %v227 = vpop.f32.mrb[0].mxu0
    %v228 = vadd.f32 %v150, %v227
    %229 = vdwg.mxu0
    %v230 = vld [vmem:[#allocation8] sm:$0xff]
    %v231 = vld [vmem:[#allocation8 + $0x8] sm:$0xff]
    %v232 = vld [vmem:[#allocation8 + $0x10] sm:$0xff]
    %v233 = vld [vmem:[#allocation8 + $0x18] sm:$0xff]
    %v234 = vld [vmem:[#allocation8 + $0x20] sm:$0xff]
    %v235 = vld [vmem:[#allocation8 + $0x28] sm:$0xff]
    %v236 = vld [vmem:[#allocation8 + $0x30] sm:$0xff]
    %v237 = vld [vmem:[#allocation8 + $0x38] sm:$0xff]
    %v238 = vld [vmem:[#allocation8 + $0x40] sm:$0xff]
    %v239 = vld [vmem:[#allocation8 + $0x48] sm:$0xff]
    %v240 = vld [vmem:[#allocation8 + $0x50] sm:$0xff]
    %v241 = vld [vmem:[#allocation8 + $0x58] sm:$0xff]
    %v242 = vld [vmem:[#allocation8 + $0x60] sm:$0xff]
    %v243 = vld [vmem:[#allocation8 + $0x68] sm:$0xff]
    %v244 = vld [vmem:[#allocation8 + $0x70] sm:$0xff]
    %v245 = vld [vmem:[#allocation8 + $0x78] sm:$0xff]
    %v246 = vld [vmem:[#allocation8 + $0x80] sm:$0xff]
    %v247 = vld [vmem:[#allocation8 + $0x88] sm:$0xff]
    %v248 = vld [vmem:[#allocation8 + $0x90] sm:$0xff]
    %v249 = vld [vmem:[#allocation8 + $0x98] sm:$0xff]
    %v250 = vld [vmem:[#allocation8 + $0xa0] sm:$0xff]
    %v251 = vld [vmem:[#allocation8 + $0xa8] sm:$0xff]
    %v252 = vld [vmem:[#allocation8 + $0xb0] sm:$0xff]
    %v253 = vld [vmem:[#allocation8 + $0xb8] sm:$0xff]
    %v254 = vld [vmem:[#allocation8 + $0xc0] sm:$0xff]
    %v255 = vld [vmem:[#allocation8 + $0xc8] sm:$0xff]
    %v256 = vld [vmem:[#allocation8 + $0xd0] sm:$0xff]
    %v257 = vld [vmem:[#allocation8 + $0xd8] sm:$0xff]
    %v258 = vld [vmem:[#allocation8 + $0xe0] sm:$0xff]
    %v259 = vld [vmem:[#allocation8 + $0xe8] sm:$0xff]
    %v260 = vld [vmem:[#allocation8 + $0xf0] sm:$0xff]
    %v261 = vld [vmem:[#allocation8 + $0xf8] sm:$0xff]
    %v262 = vld [vmem:[%s104] sm:$0x3]
    %v264 = vlaneseq
    %v265 = vshrl.u32 %v264, 7
    %v266 = vsub.s32 0, %v265
    %v267 = vrot.slane %v262, %v266
    %v268 = vlaneseq
    %v269 = vshrl.u32 %v268, 7
    %v270 = vsub.s32 1, %v269
    %v271 = vrot.slane %v262, %v270
    %274 = vmatprep.subr.mxu0 %v231
    %275 = vmatpush1.msra.mxu0 %v230
    %276 = vmatprep.subr.mxu0 %v233
    %277 = vmatpush1.msra.mxu0 %v232
    %278 = vmatprep.subr.mxu0 %v235
    %279 = vmatpush1.msra.mxu0 %v234
    %280 = vmatprep.subr.mxu0 %v237
    %281 = vmatpush1.msra.mxu0 %v236
    %282 = vmatprep.subr.mxu0 %v239
    %283 = vmatpush1.msra.mxu0 %v238
    %284 = vmatprep.subr.mxu0 %v241
    %285 = vmatpush1.msra.mxu0 %v240
    %286 = vmatprep.subr.mxu0 %v243
    %287 = vmatpush1.msra.mxu0 %v242
    %288 = vmatprep.subr.mxu0 %v245
    %289 = vmatpush1.msra.mxu0 %v244
    %290 = vmatprep.subr.mxu0 %v247
    %291 = vmatpush1.msra.mxu0 %v246
    %292 = vmatprep.subr.mxu0 %v249
    %293 = vmatpush1.msra.mxu0 %v248
    %294 = vmatprep.subr.mxu0 %v251
    %295 = vmatpush1.msra.mxu0 %v250
    %296 = vmatprep.subr.mxu0 %v253
    %297 = vmatpush1.msra.mxu0 %v252
    %298 = vmatprep.subr.mxu0 %v255
    %299 = vmatpush1.msra.mxu0 %v254
    %300 = vmatprep.subr.mxu0 %v257
    %301 = vmatpush1.msra.mxu0 %v256
    %302 = vmatprep.subr.mxu0 %v259
    %303 = vmatpush1.msra.mxu0 %v258
    %304 = vmatprep.subr.mxu0 %v261
    %305 = vmatpush1.msra.mxu0 %v260
    %306 = vmatprep.subr.mxu0 0.0
    %307 = vmatpush1.msra.mxu0 0.0
    %308 = vmatprep.subr.mxu0 0.0
    %309 = vmatpush1.msra.mxu0 0.0
    %310 = vmatprep.subr.mxu0 0.0
    %311 = vmatpush1.msra.mxu0 0.0
    %312 = vmatprep.subr.mxu0 0.0
    %313 = vmatpush1.msra.mxu0 0.0
    %314 = vmatprep.subr.mxu0 0.0
    %315 = vmatpush1.msra.mxu0 0.0
    %316 = vmatprep.subr.mxu0 0.0
    %317 = vmatpush1.msra.mxu0 0.0
    %318 = vmatprep.subr.mxu0 0.0
    %319 = vmatpush1.msra.mxu0 0.0
    %320 = vmatprep.subr.mxu0 0.0
    %321 = vmatpush1.msra.mxu0 0.0
    %322 = vmatprep.subr.mxu0 0.0
    %323 = vmatpush1.msra.mxu0 0.0
    %324 = vmatprep.subr.mxu0 0.0
    %325 = vmatpush1.msra.mxu0 0.0
    %326 = vmatprep.subr.mxu0 0.0
    %327 = vmatpush1.msra.mxu0 0.0
    %328 = vmatprep.subr.mxu0 0.0
    %329 = vmatpush1.msra.mxu0 0.0
    %330 = vmatprep.subr.mxu0 0.0
    %331 = vmatpush1.msra.mxu0 0.0
    %332 = vmatprep.subr.mxu0 0.0
    %333 = vmatpush1.msra.mxu0 0.0
    %334 = vmatprep.subr.mxu0 0.0
    %335 = vmatpush1.msra.mxu0 0.0
    %336 = vmatprep.subr.mxu0 0.0
    %337 = vmatpush1.msra.mxu0 0.0
    %338 = vmatprep.mubr.f32.mxu0 0.0
    %339 = vmatmul.mubr.f32.gmra.mrb[0].mxu0 %v107
    %v340 = vpop.f32.mrb[0].mxu0
    %v341 = vadd.f32 %v267, %v340
    %v342 = vpop.f32.mrb[0].mxu0
    %v343 = vadd.f32 %v271, %v342
    %344 = vmatprep.mubr.f32.mxu0 0.0
    %345 = vmatmul.mubr.f32.gmra.mrb[0].mxu0 %v108
    %v346 = vpop.f32.mrb[0].mxu0
    %v347 = vadd.f32 %v267, %v346
    %v348 = vpop.f32.mrb[0].mxu0
    %v349 = vadd.f32 %v271, %v348
    %350 = vdwg.mxu0
    %v351 = vxor.u32 %v220, 2147483648
    %v352 = vxor.u32 %v222, 2147483648
    %v353 = vxor.u32 %v226, 2147483648
    %v354 = vxor.u32 %v228, 2147483648
    %v355 = vmul.f32 %v351, 1.442695
    %v356 = vpow.pop %v355
    %v357 = vmul.f32 %v352, 1.442695
    %v358 = vpow.pop %v357
    %v359 = vmul.f32 %v353, 1.442695
    %v360 = vpow.pop %v359
    %v361 = vmul.f32 %v354, 1.442695
    %v362 = vpow.pop %v361
    %v363 = vadd.f32 %v356, 1.0
    %v364 = vadd.f32 %v358, 1.0
    %v365 = vadd.f32 %v360, 1.0
    %v366 = vadd.f32 %v362, 1.0
    %v367 = vrcp.pop %v363
    %v368 = vmul.f32 1.0, %v367
    %v369 = vrcp.pop %v364
    %v370 = vmul.f32 1.0, %v369
    %v371 = vrcp.pop %v365
    %v372 = vmul.f32 1.0, %v371
    %v373 = vrcp.pop %v366
    %v374 = vmul.f32 1.0, %v373
    %v375 = vmul.f32 %v220, %v368
    %v376 = vmul.f32 %v222, %v370
    %v377 = vmul.f32 %v226, %v372
    %v378 = vmul.f32 %v228, %v374
    %v379 = vmul.f32 %v375, %v341
    %v380 = vmul.f32 %v376, %v343
    %v381 = vmul.f32 %v377, %v347
    %v382 = vmul.f32 %v378, %v349
    %v383 = vld [vmem:[#allocation9] sm:$0xff]
    %v384 = vld [vmem:[#allocation9 + $0x8] sm:$0xff]
    %v385 = vld [vmem:[#allocation9 + $0x10] sm:$0xff]
    %v386 = vld [vmem:[#allocation9 + $0x18] sm:$0xff]
    %v387 = vld [vmem:[#allocation9 + $0x20] sm:$0xff]
    %v388 = vld [vmem:[#allocation9 + $0x28] sm:$0xff]
    %v389 = vld [vmem:[#allocation9 + $0x30] sm:$0xff]
    %v390 = vld [vmem:[#allocation9 + $0x38] sm:$0xff]
    %v391 = vld [vmem:[#allocation9 + $0x40] sm:$0xff]
    %v392 = vld [vmem:[#allocation9 + $0x48] sm:$0xff]
    %v393 = vld [vmem:[#allocation9 + $0x50] sm:$0xff]
    %v394 = vld [vmem:[#allocation9 + $0x58] sm:$0xff]
    %v395 = vld [vmem:[#allocation9 + $0x60] sm:$0xff]
    %v396 = vld [vmem:[#allocation9 + $0x68] sm:$0xff]
    %v397 = vld [vmem:[#allocation9 + $0x70] sm:$0xff]
    %v398 = vld [vmem:[#allocation9 + $0x78] sm:$0xff]
    %v399 = vld [vmem:[#allocation9 + $0x80] sm:$0xff]
    %v400 = vld [vmem:[#allocation9 + $0x88] sm:$0xff]
    %v401 = vld [vmem:[#allocation9 + $0x90] sm:$0xff]
    %v402 = vld [vmem:[#allocation9 + $0x98] sm:$0xff]
    %v403 = vld [vmem:[#allocation9 + $0xa0] sm:$0xff]
    %v404 = vld [vmem:[#allocation9 + $0xa8] sm:$0xff]
    %v405 = vld [vmem:[#allocation9 + $0xb0] sm:$0xff]
    %v406 = vld [vmem:[#allocation9 + $0xb8] sm:$0xff]
    %v407 = vld [vmem:[#allocation9 + $0xc0] sm:$0xff]
    %v408 = vld [vmem:[#allocation9 + $0xc8] sm:$0xff]
    %v409 = vld [vmem:[#allocation9 + $0xd0] sm:$0xff]
    %v410 = vld [vmem:[#allocation9 + $0xd8] sm:$0xff]
    %v411 = vld [vmem:[#allocation9 + $0xe0] sm:$0xff]
    %v412 = vld [vmem:[#allocation9 + $0xe8] sm:$0xff]
    %v413 = vld [vmem:[#allocation9 + $0xf0] sm:$0xff]
    %v414 = vld [vmem:[#allocation9 + $0xf8] sm:$0xff]
    %415 = vmatprep.subr.mxu0 0.0
    %416 = vmatpush1.msra.mxu0 %v383
    %417 = vmatprep.subr.mxu0 0.0
    %418 = vmatpush1.msra.mxu0 %v384
    %419 = vmatprep.subr.mxu0 0.0
    %420 = vmatpush1.msra.mxu0 %v385
    %421 = vmatprep.subr.mxu0 0.0
    %422 = vmatpush1.msra.mxu0 %v386
    %423 = vmatprep.subr.mxu0 0.0
    %424 = vmatpush1.msra.mxu0 %v387
    %425 = vmatprep.subr.mxu0 0.0
    %426 = vmatpush1.msra.mxu0 %v388
    %427 = vmatprep.subr.mxu0 0.0
    %428 = vmatpush1.msra.mxu0 %v389
    %429 = vmatprep.subr.mxu0 0.0
    %430 = vmatpush1.msra.mxu0 %v390
    %431 = vmatprep.subr.mxu0 0.0
    %432 = vmatpush1.msra.mxu0 %v391
    %433 = vmatprep.subr.mxu0 0.0
    %434 = vmatpush1.msra.mxu0 %v392
    %435 = vmatprep.subr.mxu0 0.0
    %436 = vmatpush1.msra.mxu0 %v393
    %437 = vmatprep.subr.mxu0 0.0
    %438 = vmatpush1.msra.mxu0 %v394
    %439 = vmatprep.subr.mxu0 0.0
    %440 = vmatpush1.msra.mxu0 %v395
    %441 = vmatprep.subr.mxu0 0.0
    %442 = vmatpush1.msra.mxu0 %v396
    %443 = vmatprep.subr.mxu0 0.0
    %444 = vmatpush1.msra.mxu0 %v397
    %445 = vmatprep.subr.mxu0 0.0
    %446 = vmatpush1.msra.mxu0 %v398
    %447 = vmatprep.subr.mxu0 0.0
    %448 = vmatpush1.msra.mxu0 %v399
    %449 = vmatprep.subr.mxu0 0.0
    %450 = vmatpush1.msra.mxu0 %v400
    %451 = vmatprep.subr.mxu0 0.0
    %452 = vmatpush1.msra.mxu0 %v401
    %453 = vmatprep.subr.mxu0 0.0
    %454 = vmatpush1.msra.mxu0 %v402
    %455 = vmatprep.subr.mxu0 0.0
    %456 = vmatpush1.msra.mxu0 %v403
    %457 = vmatprep.subr.mxu0 0.0
    %458 = vmatpush1.msra.mxu0 %v404
    %459 = vmatprep.subr.mxu0 0.0
    %460 = vmatpush1.msra.mxu0 %v405
    %461 = vmatprep.subr.mxu0 0.0
    %462 = vmatpush1.msra.mxu0 %v406
    %463 = vmatprep.subr.mxu0 0.0
    %464 = vmatpush1.msra.mxu0 %v407
    %465 = vmatprep.subr.mxu0 0.0
    %466 = vmatpush1.msra.mxu0 %v408
    %467 = vmatprep.subr.mxu0 0.0
    %468 = vmatpush1.msra.mxu0 %v409
    %469 = vmatprep.subr.mxu0 0.0
    %470 = vmatpush1.msra.mxu0 %v410
    %471 = vmatprep.subr.mxu0 0.0
    %472 = vmatpush1.msra.mxu0 %v411
    %473 = vmatprep.subr.mxu0 0.0
    %474 = vmatpush1.msra.mxu0 %v412
    %475 = vmatprep.subr.mxu0 0.0
    %476 = vmatpush1.msra.mxu0 %v413
    %477 = vmatprep.subr.mxu0 0.0
    %478 = vmatpush1.msra.mxu0 %v414
    %479 = vmatprep.mubr.f32.mxu0 %v380
    %480 = vmatmul.mubr.f32.gmra.mrb[0].mxu0 %v379
    %v481 = vpop.f32.mrb[0].mxu0
    %v482 = vadd.f32 0.0, %v481
    %v483 = vpop.f32.mrb[0].mxu0
    %484 = vmatprep.mubr.f32.mxu0 %v382
    %485 = vmatmul.mubr.f32.gmra.mrb[0].mxu0 %v381
    %v486 = vpop.f32.mrb[0].mxu0
    %v487 = vadd.f32 0.0, %v486
    %v488 = vpop.f32.mrb[0].mxu0
    %489 = vdwg.mxu0
    %p490 = scmp.eq.s32.totalorder 0, 0
    // Predicated region
    $region46: #{tpu_custom_call.1} parent=1 // pred_check
      %p491 = pneg %p490
    $region47: #{tpu_custom_call.1} parent=1 // pred_check_branch
      %493 = sbr.rel (%p491) target = $region49
    $region48: #{tpu_custom_call.1} parent=1 // pred_region
      %494 = vst [vmem:[#allocation2] sm:$0xff] %v482
      %495 = vst [vmem:[#allocation2 + $0x8] sm:$0xff] %v487
    $region49: #{tpu_custom_call.1} parent=1 // pred_fallthru
      _
    %p496 = scmp.ne.s32.totalorder 0, 0
    // Predicated region
    $region50: #{tpu_custom_call.1} parent=1 // pred_check
      %p497 = pneg %p496
    $region51: #{tpu_custom_call.1} parent=1 // pred_check_branch
      %499 = sbr.rel (%p497) target = $region53
    $region52: #{tpu_custom_call.1} parent=1 // pred_region
      %v500 = vld [vmem:[#allocation2] sm:$0xff]
      %v501 = vld [vmem:[#allocation2 + $0x8] sm:$0xff]
      %v502 = vadd.f32 %v500, %v482
      %v503 = vadd.f32 %v501, %v487
      %504 = vst [vmem:[#allocation2] sm:$0xff] %v502
      %505 = vst [vmem:[#allocation2 + $0x8] sm:$0xff] %v503
    $region53: #{tpu_custom_call.1} parent=1 // pred_fallthru
      _
    // Predicated region
    $region54: #{tpu_custom_call.1} parent=1 // pred_check
      %p506 = pneg %p490
    $region55: #{tpu_custom_call.1} parent=1 // pred_check_branch
      %508 = sbr.rel (%p506) target = $region57
    $region56: #{tpu_custom_call.1} parent=1 // pred_region
      %v509 = vld [vmem:[#allocation2] sm:$0xff]
      %v510 = vld [vmem:[#allocation2 + $0x8] sm:$0xff]
      %v511 = vld [vmem:[%s6] sm:$0x1]
      %v513 = vlaneseq
      %v514 = vshrl.u32 %v513, 7
      %v515 = vsub.s32 0, %v514
      %v516 = vrot.slane %v511, %v515
      %v518 = vadd.f32 %v509, %v516
      %v519 = vadd.f32 %v510, %v516
      %520 = vst [vmem:[#allocation11] sm:$0xff] %v518
      %521 = vst [vmem:[#allocation11 + $0x8] sm:$0xff] %v519
    $region57: #{tpu_custom_call.1} parent=1 // pred_fallthru
      _
    // Predicated region
    $region58: #{tpu_custom_call.1} parent=1 // pred_check
      _
    $region59: #{tpu_custom_call.1} parent=1 // pred_check_branch
      %523 = sbr.rel (0) target = $region61
    $region60: #{tpu_custom_call.1} parent=1 // pred_region
      %s525 = ssub.s32 256, 256
      %526 = vsyncadd [#allocation5], %s525
      %s527 = sshll.u32 [#allocation11], 4
      %s528 = int_to_ptr.vmem [resolvable:$true] %s527
      %533 = dma.vmem_to_hbm [thread:$0]  %s528, 256, %s7, [#allocation5], 128, 128, 8
    $region61: #{tpu_custom_call.1} parent=1 // pred_fallthru
      _
    // Predicated region
    $region62: #{tpu_custom_call.1} parent=1 // pred_check
      _
    $region63: #{tpu_custom_call.1} parent=1 // pred_check_branch
      %535 = sbr.rel (0) target = $region65
    $region64: #{tpu_custom_call.1} parent=1 // pred_region
      %536 = dma.done [#allocation5], 256
    $region65: #{tpu_custom_call.1} parent=1 // pred_fallthru
      _
    %537 = vsyncpa [#allocation4], 1
    %538 = vsyncpa [#allocation7], 1
    %539 = vsyncpa [#allocation10], 1
    %540 = vsyncpa [#allocation5], 1

</llo_original>
